<compile_context>
chip_gen: v6e
topology: v6e:2x2x1
jax: 0.10.0
libtpu: 0.0.40
codegen_flags: <defaults>
</compile_context>

<pallas_src>
import functools

import jax
import jax.numpy as jnp
from jax.experimental import pallas as pl
from jax.experimental.pallas import tpu as pltpu

HISTORY = 10
NFEATURES = 8                     # synthetic: engineered features per timestep
IN_DIM = NFEATURES * HISTORY      # 80
H1 = 500
H2 = 100
OUT_DIM = 1

H1P = 512                         # H1 padded to lane-aligned width
H2P = 128                         # H2 padded to lane-aligned width

MAX_TILE_B = 2048                 # per-step working set < 10 MiB at this size


def _round_up(n, m):
    return ((n + m - 1) // m) * m


def feedforward_kernel(xres_ref, x_ref, w1_ref, b1_ref, w2_ref, b2_ref,
                       w3_ref, b3_ref, o_ref):
    x = x_ref[...]                                            # (TB, IN_DIM) bf16
    # Linear(80, 500) + ReLU      (Dropout p=0.2 -> identity in eval mode)
    h1 = jnp.dot(x, w1_ref[...], preferred_element_type=jnp.float32)
    h1 = jnp.maximum(h1 + b1_ref[...], 0.0)                   # (TB, H1P) f32
    # Linear(500, 100) + ReLU     (Dropout p=0.2 -> identity in eval mode)
    h2 = jnp.dot(h1.astype(jnp.bfloat16), w2_ref[...],
                 preferred_element_type=jnp.float32)
    h2 = jnp.maximum(h2 + b2_ref[...], 0.0)                   # (TB, H2P) f32
    # Linear(100, 1): VPU multiply by the broadcast w3 row + lane-axis sum
    # (XLU).  Avoids an f32 multi-pass MXU dot and any h2 relayout; result is
    # already a (TB, 1) column.  Padded lanes of h2 / w3 are zero.
    y = jnp.sum(h2 * w3_ref[...], axis=-1, keepdims=True)     # (TB, 1) f32
    # + bias, + residual x[:, nfeatures*(HISTORY-1)] (kept f32 end-to-end).
    o_ref[...] = y + b3_ref[...] + xres_ref[...]
    # TODO(synk): training-mode Dropout (p=0.2) omitted; forward matches eval().


def prepare_params(w1, b1, w2, b2, w3, b3):
    """One-time padding / casting of parameters (hoisted out of the hot path).

    Weights feeding the MXU are bf16 and zero-padded to lane-aligned widths
    (zeros leave the math unchanged); biases and w3 stay f32.
    Weights are stored (in, out) so the kernel computes x @ W.
    """
    w1 = jnp.asarray(w1, jnp.float32)
    w2 = jnp.asarray(w2, jnp.float32)
    w3 = jnp.asarray(w3, jnp.float32)
    w1p = jnp.zeros((IN_DIM, H1P), jnp.bfloat16).at[:, :H1].set(
        w1.astype(jnp.bfloat16))
    b1p = jnp.zeros((1, H1P), jnp.float32).at[:, :H1].set(
        jnp.asarray(b1, jnp.float32).reshape(1, H1))
    w2p = jnp.zeros((H1P, H2P), jnp.bfloat16).at[:H1, :H2].set(
        w2.astype(jnp.bfloat16))
    b2p = jnp.zeros((1, H2P), jnp.float32).at[:, :H2].set(
        jnp.asarray(b2, jnp.float32).reshape(1, H2))
    w3p = jnp.zeros((1, H2P), jnp.float32).at[0, :H2].set(w3.reshape(H2))
    b3p = jnp.asarray(b3, jnp.float32).reshape(1, 1)
    return (w1p, b1p, w2p, b2p, w3p, b3p)


def _pick_tile_b(B):
    """Batch tile: 16-row aligned (bf16 packing); >=2 tiles once B is large
    enough so the 'parallel' batch grid can split across v7x's two TCs."""
    if B <= 256:
        return max(16, _round_up(B, 16))
    half = _round_up(-(-B // 2), 256)          # ~round_up(cdiv(B, 2), 256)
    return int(min(MAX_TILE_B, half))


@functools.partial(jax.jit, static_argnames=("tile_b",))
def _forward(x, w1p, b1p, w2p, b2p, w3p, b3p, *, tile_b):
    B = x.shape[0]
    xf = x.reshape(B, IN_DIM).astype(jnp.float32)    # glue: the .view() flatten

    b_pad = _round_up(B, tile_b)
    num_tiles = b_pad // tile_b

    # Zero-pad the batch to a multiple of tile_b (padded rows sliced off below).
    xp = jnp.zeros((b_pad, IN_DIM), jnp.float32).at[:B].set(xf)

    off = NFEATURES * (HISTORY - 1)
    xres = xp[:, off:off + 1]                         # (b_pad, 1) f32 residual
    x_bf = xp.astype(jnp.bfloat16)                    # bf16 MXU input

    out = pl.pallas_call(
        feedforward_kernel,
        out_shape=jax.ShapeDtypeStruct((b_pad, OUT_DIM), jnp.float32),
        grid=(num_tiles,),
        in_specs=[
            pl.BlockSpec((tile_b, 1), lambda i: (i, 0)),        # residual col
            pl.BlockSpec((tile_b, IN_DIM), lambda i: (i, 0)),   # x tile
            pl.BlockSpec((IN_DIM, H1P), lambda i: (0, 0)),      # w1 (resident)
            pl.BlockSpec((1, H1P), lambda i: (0, 0)),           # b1
            pl.BlockSpec((H1P, H2P), lambda i: (0, 0)),         # w2 (resident)
            pl.BlockSpec((1, H2P), lambda i: (0, 0)),           # b2
            pl.BlockSpec((1, H2P), lambda i: (0, 0)),           # w3 row (f32)
            pl.BlockSpec((1, 1), lambda i: (0, 0)),             # b3
        ],
        out_specs=pl.BlockSpec((tile_b, 1), lambda i: (i, 0)),
        compiler_params=pltpu.CompilerParams(
            dimension_semantics=("parallel",),   # shard batch grid across TCs
            vmem_limit_bytes=32 * 1024 * 1024,   # footprint <10 MiB @ tile 2048
        ),
    )(xres, x_bf, w1p, b1p, w2p, b2p, w3p, b3p)

    return out[:B]


def feedforward(x, params, tile_b=None):
    """x: (B, HISTORY, NFEATURES) or (B, IN_DIM); params from prepare_params().
    Returns (B, 1) float32."""
    B = x.shape[0]
    if tile_b is None:
        tb = _pick_tile_b(B)
    else:
        tb = max(16, _round_up(int(tile_b), 16))
    return _forward(x, *params, tile_b=tb)


def init_params(key):
    """Deterministic PyTorch-Linear-style init; weights stored as (in, out)."""
    ks = jax.random.split(key, 6)

    def linear(kw, kb, fan_in, fan_out):
        bound = 1.0 / jnp.sqrt(float(fan_in))
        w = jax.random.uniform(kw, (fan_in, fan_out), jnp.float32, -bound, bound)
        b = jax.random.uniform(kb, (1, fan_out), jnp.float32, -bound, bound)
        return w, b

    w1, b1 = linear(ks[0], ks[1], IN_DIM, H1)
    w2, b2 = linear(ks[2], ks[3], H1, H2)
    w3, b3 = linear(ks[4], ks[5], H2, OUT_DIM)
    return w1, b1, w2, b2, w3, b3


def _reference(xf, w1, b1, w2, b2, w3, b3):
    h1 = jnp.maximum(xf @ w1 + b1, 0.0)
    h2 = jnp.maximum(h1 @ w2 + b2, 0.0)
    off = NFEATURES * (HISTORY - 1)
    return h2 @ w3 + b3 + xf[:, off:off + 1]


if __name__ == "__main__":
    key = jax.random.PRNGKey(0)
    k_x, k_p, k_x2 = jax.random.split(key, 3)

    w1, b1, w2, b2, w3, b3 = init_params(k_p)
    params = prepare_params(w1, b1, w2, b2, w3, b3)   # padded/cast once

    # Small demo batch (launch/DMA-latency bound; single 16-row tile).
    B = 2
    x = jax.random.normal(k_x, (B, HISTORY, NFEATURES), dtype=jnp.float32)
    out = jax.block_until_ready(feedforward(x, params))
    ref = _reference(x.reshape(B, IN_DIM), w1, b1, w2, b2, w3, b3)
    assert out.shape == (B, OUT_DIM)
    assert jnp.allclose(out, ref, atol=2e-2, rtol=2e-2), \
        float(jnp.max(jnp.abs(out - ref)))

    # Multi-tile path: default tile picker gives tile_b=256 -> 2 grid steps
    # (both v7x TensorCores active); non-multiple tail is padded + sliced.
    B2 = 300
    x2 = jax.random.normal(k_x2, (B2, HISTORY, NFEATURES), dtype=jnp.float32)
    out2 = jax.block_until_ready(feedforward(x2, params))
    ref2 = _reference(x2.reshape(B2, IN_DIM), w1, b1, w2, b2, w3, b3)
    assert out2.shape == (B2, OUT_DIM)
    assert jnp.allclose(out2, ref2, atol=2e-2, rtol=2e-2), \
        float(jnp.max(jnp.abs(out2 - ref2)))

    print("KERNEL_OK")
</pallas_src>

<mosaic_0001>
module attributes {stable_mosaic.version = 11 : i64} {
  func.func @feedforward_kernel(%arg0: i32, %arg1: memref<16x1xf32, #tpu.memory_space<vmem>>, %arg2: memref<16x80xbf16, #tpu.memory_space<vmem>>, %arg3: memref<80x512xbf16, #tpu.memory_space<vmem>>, %arg4: memref<1x512xf32, #tpu.memory_space<vmem>>, %arg5: memref<512x128xbf16, #tpu.memory_space<vmem>>, %arg6: memref<1x128xf32, #tpu.memory_space<vmem>>, %arg7: memref<1x128xf32, #tpu.memory_space<vmem>>, %arg8: memref<1x1xf32, #tpu.memory_space<vmem>>, %arg9: memref<16x1xf32, #tpu.memory_space<vmem>>) attributes {dimension_semantics = [#tpu.dimension_semantics<parallel>], iteration_bounds = array<i64: 1>, scalar_prefetch = 0 : i64, scratch_operands = 0 : i64, tpu.core_type = #tpu.core_type<tc>, window_params = [{transform_indices = @transform_0, window_bounds = array<i64: 16, 1>}, {transform_indices = @transform_1, window_bounds = array<i64: 16, 80>}, {pipeline_mode = #tpu.pipeline_mode<synchronous>, transform_indices = @transform_2, window_bounds = array<i64: 80, 512>}, {pipeline_mode = #tpu.pipeline_mode<synchronous>, transform_indices = @transform_3, window_bounds = array<i64: 1, 512>}, {pipeline_mode = #tpu.pipeline_mode<synchronous>, transform_indices = @transform_4, window_bounds = array<i64: 512, 128>}, {pipeline_mode = #tpu.pipeline_mode<synchronous>, transform_indices = @transform_5, window_bounds = array<i64: 1, 128>}, {pipeline_mode = #tpu.pipeline_mode<synchronous>, transform_indices = @transform_6, window_bounds = array<i64: 1, 128>}, {pipeline_mode = #tpu.pipeline_mode<synchronous>, transform_indices = @transform_7, window_bounds = array<i64: 1, 1>}, {transform_indices = @transform_8, window_bounds = array<i64: 16, 1>}]} {
    %c0 = arith.constant 0 : index
    %c0_0 = arith.constant 0 : index
    %0 = vector.load %arg2[%c0, %c0_0] : memref<16x80xbf16, #tpu.memory_space<vmem>>, vector<16x80xbf16>
    %c0_1 = arith.constant 0 : index
    %c0_2 = arith.constant 0 : index
    %1 = vector.load %arg3[%c0_1, %c0_2] : memref<80x512xbf16, #tpu.memory_space<vmem>>, vector<80x512xbf16>
    %cst = arith.constant dense<0.000000e+00> : vector<16x512xf32>
    %2 = tpu.matmul %0, %1, %cst {dimension_numbers = #tpu.dot_dimension_numbers<[1], [0], [0], [1], [0, 0, 1, 1], [], []>} : vector<16x80xbf16>, vector<80x512xbf16>, vector<16x512xf32> -> vector<16x512xf32>
    %c0_3 = arith.constant 0 : index
    %c0_4 = arith.constant 0 : index
    %3 = vector.load %arg4[%c0_3, %c0_4] : memref<1x512xf32, #tpu.memory_space<vmem>>, vector<1x512xf32>
    %4 = vector.broadcast %3 : vector<1x512xf32> to vector<16x512xf32>
    %5 = arith.addf %2, %4 : vector<16x512xf32>
    %cst_5 = arith.constant 0.000000e+00 : f32
    %6 = vector.broadcast %cst_5 : f32 to vector<16x512xf32>
    %7 = arith.maximumf %5, %6 : vector<16x512xf32>
    %8 = arith.truncf %7 : vector<16x512xf32> to vector<16x512xbf16>
    %c0_6 = arith.constant 0 : index
    %c0_7 = arith.constant 0 : index
    %9 = vector.load %arg5[%c0_6, %c0_7] : memref<512x128xbf16, #tpu.memory_space<vmem>>, vector<512x128xbf16>
    %cst_8 = arith.constant dense<0.000000e+00> : vector<16x128xf32>
    %10 = tpu.matmul %8, %9, %cst_8 {dimension_numbers = #tpu.dot_dimension_numbers<[1], [0], [0], [1], [0, 0, 1, 1], [], []>} : vector<16x512xbf16>, vector<512x128xbf16>, vector<16x128xf32> -> vector<16x128xf32>
    %c0_9 = arith.constant 0 : index
    %c0_10 = arith.constant 0 : index
    %11 = vector.load %arg6[%c0_9, %c0_10] : memref<1x128xf32, #tpu.memory_space<vmem>>, vector<1x128xf32>
    %12 = vector.broadcast %11 : vector<1x128xf32> to vector<16x128xf32>
    %13 = arith.addf %10, %12 : vector<16x128xf32>
    %cst_11 = arith.constant 0.000000e+00 : f32
    %14 = vector.broadcast %cst_11 : f32 to vector<16x128xf32>
    %15 = arith.maximumf %13, %14 : vector<16x128xf32>
    %c0_12 = arith.constant 0 : index
    %c0_13 = arith.constant 0 : index
    %16 = vector.load %arg7[%c0_12, %c0_13] : memref<1x128xf32, #tpu.memory_space<vmem>>, vector<1x128xf32>
    %17 = vector.broadcast %16 : vector<1x128xf32> to vector<16x128xf32>
    %18 = arith.mulf %15, %17 : vector<16x128xf32>
    %cst_14 = arith.constant dense<0.000000e+00> : vector<16xf32>
    %19 = vector.multi_reduction <add>, %18, %cst_14 [1] : vector<16x128xf32> to vector<16xf32>
    %20 = vector.shape_cast %19 : vector<16xf32> to vector<16x1xf32>
    %c0_15 = arith.constant 0 : index
    %c0_16 = arith.constant 0 : index
    %21 = vector.load %arg8[%c0_15, %c0_16] : memref<1x1xf32, #tpu.memory_space<vmem>>, vector<1x1xf32>
    %22 = vector.broadcast %21 : vector<1x1xf32> to vector<16x1xf32>
    %23 = arith.addf %20, %22 : vector<16x1xf32>
    %c0_17 = arith.constant 0 : index
    %c0_18 = arith.constant 0 : index
    %24 = vector.load %arg1[%c0_17, %c0_18] : memref<16x1xf32, #tpu.memory_space<vmem>>, vector<16x1xf32>
    %25 = arith.addf %23, %24 : vector<16x1xf32>
    %c0_19 = arith.constant 0 : index
    %c0_20 = arith.constant 0 : index
    %26 = vector.load %arg9[%c0_19, %c0_20] : memref<16x1xf32, #tpu.memory_space<vmem>>, vector<16x1xf32>
    tpu.vector_store %arg9[%c0_19, %c0_20], %25 {strides = array<i32>} : memref<16x1xf32, #tpu.memory_space<vmem>>, vector<16x1xf32>,
    return
  }
  func.func @transform_0(%arg0: i32) -> (i32, i32) {
    %c0_i32 = arith.constant 0 : i32
    %c0_i32_0 = arith.constant 0 : i32
    return %arg0, %c0_i32 : i32, i32
  }
  func.func @transform_1(%arg0: i32) -> (i32, i32) {
    %c0_i32 = arith.constant 0 : i32
    %c0_i32_0 = arith.constant 0 : i32
    return %arg0, %c0_i32 : i32, i32
  }
  func.func @transform_2(%arg0: i32) -> (i32, i32) {
    %c0_i32 = arith.constant 0 : i32
    %c0_i32_0 = arith.constant 0 : i32
    %c0_i32_1 = arith.constant 0 : i32
    return %c0_i32, %c0_i32_0 : i32, i32
  }
  func.func @transform_3(%arg0: i32) -> (i32, i32) {
    %c0_i32 = arith.constant 0 : i32
    %c0_i32_0 = arith.constant 0 : i32
    %c0_i32_1 = arith.constant 0 : i32
    return %c0_i32, %c0_i32_0 : i32, i32
  }
  func.func @transform_4(%arg0: i32) -> (i32, i32) {
    %c0_i32 = arith.constant 0 : i32
    %c0_i32_0 = arith.constant 0 : i32
    %c0_i32_1 = arith.constant 0 : i32
    return %c0_i32, %c0_i32_0 : i32, i32
  }
  func.func @transform_5(%arg0: i32) -> (i32, i32) {
    %c0_i32 = arith.constant 0 : i32
    %c0_i32_0 = arith.constant 0 : i32
    %c0_i32_1 = arith.constant 0 : i32
    return %c0_i32, %c0_i32_0 : i32, i32
  }
  func.func @transform_6(%arg0: i32) -> (i32, i32) {
    %c0_i32 = arith.constant 0 : i32
    %c0_i32_0 = arith.constant 0 : i32
    %c0_i32_1 = arith.constant 0 : i32
    return %c0_i32, %c0_i32_0 : i32, i32
  }
  func.func @transform_7(%arg0: i32) -> (i32, i32) {
    %c0_i32 = arith.constant 0 : i32
    %c0_i32_0 = arith.constant 0 : i32
    %c0_i32_1 = arith.constant 0 : i32
    return %c0_i32, %c0_i32_0 : i32, i32
  }
  func.func @transform_8(%arg0: i32) -> (i32, i32) {
    %c0_i32 = arith.constant 0 : i32
    %c0_i32_0 = arith.constant 0 : i32
    return %arg0, %c0_i32 : i32, i32
  }
}

</mosaic_0001>

<llo_original>
// kernel: _forward.1
$region0: #{_forward.1}
  #allocation0 [shape = 'u32[]', space=smem, size = 0x4, offset = 0x4, fixed_abs, tag = 'smem constant byte address 0x4 - core index']
  #allocation1 [shape = 'u32[144,128]{1,0:T(1,128)}', space=vmem, size = 0x12000, scoped, tag = 'internal scratch']
  #allocation2 [shape = 'f32[1,1]{1,0:T(1,128)S(1)}', space=vmem, size = 0x200, scoped, tag = 'scoped memory for _forward.1']
  %s0 = inlined_call_operand.vmem [shape: f32[16,1], index: 0, kind: input, shape index: {}]
  %s1 = inlined_call_operand.vmem [shape: bf16[16,80], index: 1, kind: input, shape index: {}]
  %s2 = inlined_call_operand.hbm [shape: bf16[80,512], index: 2, kind: input, shape index: {}]
  %s3 = inlined_call_operand.vmem [shape: f32[1,512], index: 3, kind: input, shape index: {}]
  %s4 = inlined_call_operand.hbm [shape: bf16[512,128], index: 4, kind: input, shape index: {}]
  %s5 = inlined_call_operand.vmem [shape: f32[1,128], index: 5, kind: input, shape index: {}]
  %s6 = inlined_call_operand.vmem [shape: f32[1,128], index: 6, kind: input, shape index: {}]
  %s7 = inlined_call_operand.<no memory space> [shape: f32[1,1], index: 7, kind: input, shape index: {}]
  %s8 = inlined_call_operand.vmem [shape: f32[16,1], index: 8, kind: output, shape index: {}]
  %s9 = sld [smem:[#allocation0]]
  $region50: #{_forward.1} parent=0
    _
  %s11 = ssub.s32 1, %s9
  %s12 = scalar_select 0, %s11, %s9
  %v13 = vstv %s7
  %14 = vst [vmem:[#allocation2] sm:$0x1] %v13
  $region1: #{_forward.1} parent=0
    #allocation3 [shape = 'u8[81920]{0}', space=vmem, size = 0x14000, scoped, tag = 'input window, operand 2, single buffered']
    #allocation4 [shape = 's32[1]{0}', space=sflag, size = 0x4, scoped, tag = 'scoped memory for _forward.1']
    #allocation5 [shape = 'u8[131072]{0}', space=vmem, size = 0x20000, scoped, tag = 'input window, operand 4, single buffered']
    #allocation6 [shape = 's32[1]{0}', space=sflag, size = 0x4, scoped, tag = 'scoped memory for _forward.1']
    %15 = vsyncpa [#allocation4], 0
    %16 = vsyncpa [#allocation6], 0
    // Predicated region
    $region2: #{_forward.1} parent=1 // pred_check
      _
    $region3: #{_forward.1} parent=1 // pred_check_branch
      %18 = sbr.rel (0) target = $region5
    $region4: #{_forward.1} parent=1 // pred_region
      _
    $region5: #{_forward.1} parent=1 // pred_fallthru
      _
    // Predicated region
    $region6: #{_forward.1} parent=1 // pred_check
      _
    $region7: #{_forward.1} parent=1 // pred_check_branch
      %20 = sbr.rel (0) target = $region9
    $region8: #{_forward.1} parent=1 // pred_region
      _
    $region9: #{_forward.1} parent=1 // pred_fallthru
      _
    // Predicated region
    $region10: #{_forward.1} parent=1 // pred_check
      _
    $region11: #{_forward.1} parent=1 // pred_check_branch
      %22 = sbr.rel (0) target = $region13
    $region12: #{_forward.1} parent=1 // pred_region
      %s24 = ssub.s32 2560, 2560
      %25 = vsyncadd [#allocation4], %s24
      %s26 = sshll.u32 [#allocation3], 4
      %s27 = int_to_ptr.vmem [resolvable:$true] %s26
      %32 = dma.hbm_to_vmem [thread:$0]  %s2, 2560, %s27, [#allocation4], 256, 256, 16
    $region13: #{_forward.1} parent=1 // pred_fallthru
      _
    // Predicated region
    $region14: #{_forward.1} parent=1 // pred_check
      _
    $region15: #{_forward.1} parent=1 // pred_check_branch
      %34 = sbr.rel (0) target = $region17
    $region16: #{_forward.1} parent=1 // pred_region
      _
    $region17: #{_forward.1} parent=1 // pred_fallthru
      _
    // Predicated region
    $region18: #{_forward.1} parent=1 // pred_check
      _
    $region19: #{_forward.1} parent=1 // pred_check_branch
      %36 = sbr.rel (0) target = $region21
    $region20: #{_forward.1} parent=1 // pred_region
      %s38 = ssub.s32 4096, 4096
      %39 = vsyncadd [#allocation6], %s38
      %s40 = sshll.u32 [#allocation5], 4
      %s41 = int_to_ptr.vmem [resolvable:$true] %s40
      %46 = dma.hbm_to_vmem [thread:$0]  %s4, 4096, %s41, [#allocation6], 64, 64, 4
    $region21: #{_forward.1} parent=1 // pred_fallthru
      _
    // Predicated region
    $region22: #{_forward.1} parent=1 // pred_check
      _
    $region23: #{_forward.1} parent=1 // pred_check_branch
      %48 = sbr.rel (0) target = $region25
    $region24: #{_forward.1} parent=1 // pred_region
      _
    $region25: #{_forward.1} parent=1 // pred_fallthru
      _
    // Predicated region
    $region26: #{_forward.1} parent=1 // pred_check
      _
    $region27: #{_forward.1} parent=1 // pred_check_branch
      %50 = sbr.rel (0) target = $region29
    $region28: #{_forward.1} parent=1 // pred_region
      _
    $region29: #{_forward.1} parent=1 // pred_fallthru
      _
    // Predicated region
    $region30: #{_forward.1} parent=1 // pred_check
      _
    $region31: #{_forward.1} parent=1 // pred_check_branch
      %52 = sbr.rel (0) target = $region33
    $region32: #{_forward.1} parent=1 // pred_region
      _
    $region33: #{_forward.1} parent=1 // pred_fallthru
      _
    // Predicated region
    $region34: #{_forward.1} parent=1 // pred_check
      _
    $region35: #{_forward.1} parent=1 // pred_check_branch
      %54 = sbr.rel (0) target = $region37
    $region36: #{_forward.1} parent=1 // pred_region
      %55 = dma.done [#allocation4], 2560
    $region37: #{_forward.1} parent=1 // pred_fallthru
      _
    // Predicated region
    $region38: #{_forward.1} parent=1 // pred_check
      _
    $region39: #{_forward.1} parent=1 // pred_check_branch
      %57 = sbr.rel (0) target = $region41
    $region40: #{_forward.1} parent=1 // pred_region
      %58 = dma.done [#allocation6], 4096
    $region41: #{_forward.1} parent=1 // pred_fallthru
      _
    %v60 = vld [vmem:[%s1] sm:$0xf]
    %v61 = vld [vmem:[%s1 + $0x4] sm:$0xf]
    %v62 = vld [vmem:[#allocation3] sm:$0xff]
    %v63 = vld [vmem:[#allocation3 + $0x8] sm:$0xff]
    %v64 = vld [vmem:[#allocation3 + $0x10] sm:$0xff]
    %v65 = vld [vmem:[#allocation3 + $0x18] sm:$0xff]
    %v66 = vld [vmem:[#allocation3 + $0x20] sm:$0xff]
    %v67 = vld [vmem:[#allocation3 + $0x28] sm:$0xff]
    %v68 = vld [vmem:[#allocation3 + $0x30] sm:$0xff]
    %v69 = vld [vmem:[#allocation3 + $0x38] sm:$0xff]
    %v70 = vld [vmem:[#allocation3 + $0x40] sm:$0xff]
    %v71 = vld [vmem:[#allocation3 + $0x48] sm:$0xff]
    %v72 = vld [vmem:[#allocation3 + $0x50] sm:$0xff]
    %v73 = vld [vmem:[#allocation3 + $0x58] sm:$0xff]
    %v74 = vld [vmem:[#allocation3 + $0x60] sm:$0xff]
    %v75 = vld [vmem:[#allocation3 + $0x68] sm:$0xff]
    %v76 = vld [vmem:[#allocation3 + $0x70] sm:$0xff]
    %v77 = vld [vmem:[#allocation3 + $0x78] sm:$0xff]
    %v78 = vld [vmem:[#allocation3 + $0x80] sm:$0xff]
    %v79 = vld [vmem:[#allocation3 + $0x88] sm:$0xff]
    %v80 = vld [vmem:[#allocation3 + $0x90] sm:$0xff]
    %v81 = vld [vmem:[#allocation3 + $0x98] sm:$0xff]
    %v82 = vld [vmem:[%s3] sm:$0xf]
    %v84 = vlaneseq
    %v85 = vshrl.u32 %v84, 7
    %v86 = vsub.s32 0, %v85
    %v87 = vrot.slane %v82, %v86
    %v88 = vlaneseq
    %v89 = vshrl.u32 %v88, 7
    %v90 = vsub.s32 1, %v89
    %v91 = vrot.slane %v82, %v90
    %v92 = vlaneseq
    %v93 = vshrl.u32 %v92, 7
    %v94 = vsub.s32 2, %v93
    %v95 = vrot.slane %v82, %v94
    %v96 = vlaneseq
    %v97 = vshrl.u32 %v96, 7
    %v98 = vsub.s32 3, %v97
    %v99 = vrot.slane %v82, %v98
    %v106 = vunpack.c.l.b16 %v60
    %v107 = vunpack.c.l.b16 %v61
    %v108 = vpack.c.b16 %v107, %v106
    %v129 = vunpack.c.l.b16 %v62
    %v130 = vunpack.c.h.b16 %v62
    %v131 = vunpack.c.l.b16 %v63
    %v132 = vunpack.c.h.b16 %v63
    %v133 = vunpack.c.l.b16 %v64
    %v134 = vunpack.c.h.b16 %v64
    %v135 = vunpack.c.l.b16 %v65
    %v136 = vunpack.c.h.b16 %v65
    %v137 = vunpack.c.l.b16 %v66
    %v138 = vunpack.c.h.b16 %v66
    %v139 = vunpack.c.l.b16 %v67
    %v140 = vunpack.c.h.b16 %v67
    %v141 = vunpack.c.l.b16 %v68
    %v142 = vunpack.c.h.b16 %v68
    %v143 = vunpack.c.l.b16 %v69
    %v144 = vunpack.c.h.b16 %v69
    %v145 = vunpack.c.l.b16 %v70
    %v146 = vunpack.c.h.b16 %v70
    %v147 = vunpack.c.l.b16 %v71
    %v148 = vunpack.c.h.b16 %v71
    %v149 = vunpack.c.l.b16 %v72
    %v150 = vunpack.c.h.b16 %v72
    %v151 = vunpack.c.l.b16 %v73
    %v152 = vunpack.c.h.b16 %v73
    %v153 = vunpack.c.l.b16 %v74
    %v154 = vunpack.c.h.b16 %v74
    %v155 = vunpack.c.l.b16 %v75
    %v156 = vunpack.c.h.b16 %v75
    %v157 = vunpack.c.l.b16 %v76
    %v158 = vunpack.c.h.b16 %v76
    %v159 = vunpack.c.l.b16 %v77
    %v160 = vunpack.c.h.b16 %v77
    %v161 = vunpack.c.l.b16 %v78
    %v162 = vunpack.c.h.b16 %v78
    %v163 = vunpack.c.l.b16 %v79
    %v164 = vunpack.c.h.b16 %v79
    %v165 = vunpack.c.l.b16 %v80
    %v166 = vunpack.c.h.b16 %v80
    %v167 = vunpack.c.l.b16 %v81
    %v168 = vunpack.c.h.b16 %v81
    %v169 = vpack.c.b16 %v133, %v129
    %v170 = vpack.c.b16 %v134, %v130
    %v171 = vpack.c.b16 %v135, %v131
    %v172 = vpack.c.b16 %v136, %v132
    %v173 = vpack.c.b16 %v141, %v137
    %v174 = vpack.c.b16 %v142, %v138
    %v175 = vpack.c.b16 %v143, %v139
    %v176 = vpack.c.b16 %v144, %v140
    %v177 = vpack.c.b16 %v149, %v145
    %v178 = vpack.c.b16 %v150, %v146
    %v179 = vpack.c.b16 %v151, %v147
    %v180 = vpack.c.b16 %v152, %v148
    %v181 = vpack.c.b16 %v157, %v153
    %v182 = vpack.c.b16 %v158, %v154
    %v183 = vpack.c.b16 %v159, %v155
    %v184 = vpack.c.b16 %v160, %v156
    %v185 = vpack.c.b16 %v165, %v161
    %v186 = vpack.c.b16 %v166, %v162
    %v187 = vpack.c.b16 %v167, %v163
    %v188 = vpack.c.b16 %v168, %v164
    %vm209 = vcmask 654336
    %v211 = vsel %vm209, %v108, 0
    %213 = vmatprep.subr.bf16.mxu0 0
    %214 = vmatpush1.bf16.msra.mxu0 0
    %215 = vmatprep.subr.bf16.mxu0 0
    %216 = vmatpush1.bf16.msra.mxu0 0
    %217 = vmatprep.subr.bf16.mxu0 0
    %218 = vmatpush1.bf16.msra.mxu0 0
    %219 = vmatprep.subr.bf16.mxu0 %v186
    %220 = vmatpush1.bf16.msra.mxu0 %v185
    %221 = vmatprep.subr.bf16.mxu0 %v182
    %222 = vmatpush1.bf16.msra.mxu0 %v181
    %223 = vmatprep.subr.bf16.mxu0 %v178
    %224 = vmatpush1.bf16.msra.mxu0 %v177
    %225 = vmatprep.subr.bf16.mxu0 %v174
    %226 = vmatpush1.bf16.msra.mxu0 %v173
    %227 = vmatprep.subr.bf16.mxu0 %v170
    %228 = vmatpush1.bf16.msra.mxu0 %v169
    %229 = vmatprep.subr.bf16.mxu0 0
    %230 = vmatpush2.bf16.msra.mxu0 0
    %231 = vmatprep.subr.bf16.mxu0 0
    %232 = vmatpush2.bf16.msra.mxu0 0
    %233 = vmatprep.subr.bf16.mxu0 0
    %234 = vmatpush2.bf16.msra.mxu0 0
    %235 = vmatprep.subr.bf16.mxu0 0
    %236 = vmatpush2.bf16.msra.mxu0 0
    %237 = vmatprep.subr.bf16.mxu0 0
    %238 = vmatpush2.bf16.msra.mxu0 0
    %239 = vmatprep.subr.bf16.mxu0 0
    %240 = vmatpush2.bf16.msra.mxu0 0
    %241 = vmatprep.subr.bf16.mxu0 0
    %242 = vmatpush2.bf16.msra.mxu0 0
    %243 = vmatprep.subr.bf16.mxu0 0
    %244 = vmatpush2.bf16.msra.mxu0 0
    %245 = vmatprep.mubr.bf16.mxu0 0
    %246 = vmatmul.mubr.bf16.gmra.mxu0 %v211
    %v247 = vpop.f32.mrf.mxu0
    %v248 = vadd.f32 %v87, %v247
    %v249 = vpop.f32.mrf.mxu0
    %v250 = vadd.f32 %v91, %v249
    %v251 = vpop.f32.mrf.mxu0
    %v252 = vadd.f32 %v87, %v251
    %v253 = vpop.f32.mrf.mxu0
    %v254 = vadd.f32 %v91, %v253
    %255 = vdwg.mxu0
    %256 = vmatprep.subr.bf16.mxu0 0
    %257 = vmatpush1.bf16.msra.mxu0 0
    %258 = vmatprep.subr.bf16.mxu0 0
    %259 = vmatpush1.bf16.msra.mxu0 0
    %260 = vmatprep.subr.bf16.mxu0 0
    %261 = vmatpush1.bf16.msra.mxu0 0
    %262 = vmatprep.subr.bf16.mxu0 %v188
    %263 = vmatpush1.bf16.msra.mxu0 %v187
    %264 = vmatprep.subr.bf16.mxu0 %v184
    %265 = vmatpush1.bf16.msra.mxu0 %v183
    %266 = vmatprep.subr.bf16.mxu0 %v180
    %267 = vmatpush1.bf16.msra.mxu0 %v179
    %268 = vmatprep.subr.bf16.mxu0 %v176
    %269 = vmatpush1.bf16.msra.mxu0 %v175
    %270 = vmatprep.subr.bf16.mxu0 %v172
    %271 = vmatpush1.bf16.msra.mxu0 %v171
    %272 = vmatprep.subr.bf16.mxu0 0
    %273 = vmatpush2.bf16.msra.mxu0 0
    %274 = vmatprep.subr.bf16.mxu0 0
    %275 = vmatpush2.bf16.msra.mxu0 0
    %276 = vmatprep.subr.bf16.mxu0 0
    %277 = vmatpush2.bf16.msra.mxu0 0
    %278 = vmatprep.subr.bf16.mxu0 0
    %279 = vmatpush2.bf16.msra.mxu0 0
    %280 = vmatprep.subr.bf16.mxu0 0
    %281 = vmatpush2.bf16.msra.mxu0 0
    %282 = vmatprep.subr.bf16.mxu0 0
    %283 = vmatpush2.bf16.msra.mxu0 0
    %284 = vmatprep.subr.bf16.mxu0 0
    %285 = vmatpush2.bf16.msra.mxu0 0
    %286 = vmatprep.subr.bf16.mxu0 0
    %287 = vmatpush2.bf16.msra.mxu0 0
    %288 = vmatprep.mubr.bf16.mxu0 0
    %289 = vmatmul.mubr.bf16.gmra.mxu0 %v211
    %v290 = vpop.f32.mrf.mxu0
    %v291 = vadd.f32 %v95, %v290
    %v292 = vpop.f32.mrf.mxu0
    %v293 = vadd.f32 %v99, %v292
    %v294 = vpop.f32.mrf.mxu0
    %v295 = vadd.f32 %v95, %v294
    %v296 = vpop.f32.mrf.mxu0
    %v297 = vadd.f32 %v99, %v296
    %298 = vdwg.mxu0
    %v299 = vmax.f32 %v248, 0.0
    %v300 = vmax.f32 %v250, 0.0
    %v301 = vmax.f32 %v291, 0.0
    %v302 = vmax.f32 %v293, 0.0
    %v303 = vmax.f32 %v252, 0.0
    %v304 = vmax.f32 %v254, 0.0
    %v305 = vmax.f32 %v295, 0.0
    %v306 = vmax.f32 %v297, 0.0
    %v307 = vpack.c.bf16 %v303, %v299
    %v308 = vpack.c.bf16 %v304, %v300
    %v309 = vpack.c.bf16 %v305, %v301
    %v310 = vpack.c.bf16 %v306, %v302
    %v311 = vld [vmem:[#allocation5] sm:$0xf]
    %v312 = vld [vmem:[#allocation5 + $0x4] sm:$0xf]
    %v313 = vld [vmem:[#allocation5 + $0x8] sm:$0xf]
    %v314 = vld [vmem:[#allocation5 + $0xc] sm:$0xf]
    %v315 = vld [vmem:[#allocation5 + $0x10] sm:$0xf]
    %v316 = vld [vmem:[#allocation5 + $0x14] sm:$0xf]
    %v317 = vld [vmem:[#allocation5 + $0x18] sm:$0xf]
    %v318 = vld [vmem:[#allocation5 + $0x1c] sm:$0xf]
    %v319 = vld [vmem:[#allocation5 + $0x20] sm:$0xf]
    %v320 = vld [vmem:[#allocation5 + $0x24] sm:$0xf]
    %v321 = vld [vmem:[#allocation5 + $0x28] sm:$0xf]
    %v322 = vld [vmem:[#allocation5 + $0x2c] sm:$0xf]
    %v323 = vld [vmem:[#allocation5 + $0x30] sm:$0xf]
    %v324 = vld [vmem:[#allocation5 + $0x34] sm:$0xf]
    %v325 = vld [vmem:[#allocation5 + $0x38] sm:$0xf]
    %v326 = vld [vmem:[#allocation5 + $0x3c] sm:$0xf]
    %v327 = vld [vmem:[#allocation5 + $0x40] sm:$0xf]
    %v328 = vld [vmem:[#allocation5 + $0x44] sm:$0xf]
    %v329 = vld [vmem:[#allocation5 + $0x48] sm:$0xf]
    %v330 = vld [vmem:[#allocation5 + $0x4c] sm:$0xf]
    %v331 = vld [vmem:[#allocation5 + $0x50] sm:$0xf]
    %v332 = vld [vmem:[#allocation5 + $0x54] sm:$0xf]
    %v333 = vld [vmem:[#allocation5 + $0x58] sm:$0xf]
    %v334 = vld [vmem:[#allocation5 + $0x5c] sm:$0xf]
    %v335 = vld [vmem:[#allocation5 + $0x60] sm:$0xf]
    %v336 = vld [vmem:[#allocation5 + $0x64] sm:$0xf]
    %v337 = vld [vmem:[#allocation5 + $0x68] sm:$0xf]
    %v338 = vld [vmem:[#allocation5 + $0x6c] sm:$0xf]
    %v339 = vld [vmem:[#allocation5 + $0x70] sm:$0xf]
    %v340 = vld [vmem:[#allocation5 + $0x74] sm:$0xf]
    %v341 = vld [vmem:[#allocation5 + $0x78] sm:$0xf]
    %v342 = vld [vmem:[#allocation5 + $0x7c] sm:$0xf]
    %v343 = vld [vmem:[#allocation5 + $0x80] sm:$0xf]
    %v344 = vld [vmem:[#allocation5 + $0x84] sm:$0xf]
    %v345 = vld [vmem:[#allocation5 + $0x88] sm:$0xf]
    %v346 = vld [vmem:[#allocation5 + $0x8c] sm:$0xf]
    %v347 = vld [vmem:[#allocation5 + $0x90] sm:$0xf]
    %v348 = vld [vmem:[#allocation5 + $0x94] sm:$0xf]
    %v349 = vld [vmem:[#allocation5 + $0x98] sm:$0xf]
    %v350 = vld [vmem:[#allocation5 + $0x9c] sm:$0xf]
    %v351 = vld [vmem:[#allocation5 + $0xa0] sm:$0xf]
    %v352 = vld [vmem:[#allocation5 + $0xa4] sm:$0xf]
    %v353 = vld [vmem:[#allocation5 + $0xa8] sm:$0xf]
    %v354 = vld [vmem:[#allocation5 + $0xac] sm:$0xf]
    %v355 = vld [vmem:[#allocation5 + $0xb0] sm:$0xf]
    %v356 = vld [vmem:[#allocation5 + $0xb4] sm:$0xf]
    %v357 = vld [vmem:[#allocation5 + $0xb8] sm:$0xf]
    %v358 = vld [vmem:[#allocation5 + $0xbc] sm:$0xf]
    %v359 = vld [vmem:[#allocation5 + $0xc0] sm:$0xf]
    %v360 = vld [vmem:[#allocation5 + $0xc4] sm:$0xf]
    %v361 = vld [vmem:[#allocation5 + $0xc8] sm:$0xf]
    %v362 = vld [vmem:[#allocation5 + $0xcc] sm:$0xf]
    %v363 = vld [vmem:[#allocation5 + $0xd0] sm:$0xf]
    %v364 = vld [vmem:[#allocation5 + $0xd4] sm:$0xf]
    %v365 = vld [vmem:[#allocation5 + $0xd8] sm:$0xf]
    %v366 = vld [vmem:[#allocation5 + $0xdc] sm:$0xf]
    %v367 = vld [vmem:[#allocation5 + $0xe0] sm:$0xf]
    %v368 = vld [vmem:[#allocation5 + $0xe4] sm:$0xf]
    %v369 = vld [vmem:[#allocation5 + $0xe8] sm:$0xf]
    %v370 = vld [vmem:[#allocation5 + $0xec] sm:$0xf]
    %v371 = vld [vmem:[#allocation5 + $0xf0] sm:$0xf]
    %v372 = vld [vmem:[#allocation5 + $0xf4] sm:$0xf]
    %v373 = vld [vmem:[#allocation5 + $0xf8] sm:$0xf]
    %v374 = vld [vmem:[#allocation5 + $0xfc] sm:$0xf]
    %v375 = vld [vmem:[%s5] sm:$0x1]
    %v377 = vlaneseq
    %v378 = vshrl.u32 %v377, 7
    %v379 = vsub.s32 0, %v378
    %v380 = vrot.slane %v375, %v379
    %v446 = vunpack.c.l.b16 %v311
    %v447 = vunpack.c.l.b16 %v312
    %v448 = vunpack.c.l.b16 %v313
    %v449 = vunpack.c.l.b16 %v314
    %v450 = vunpack.c.l.b16 %v315
    %v451 = vunpack.c.l.b16 %v316
    %v452 = vunpack.c.l.b16 %v317
    %v453 = vunpack.c.l.b16 %v318
    %v454 = vunpack.c.l.b16 %v319
    %v455 = vunpack.c.l.b16 %v320
    %v456 = vunpack.c.l.b16 %v321
    %v457 = vunpack.c.l.b16 %v322
    %v458 = vunpack.c.l.b16 %v323
    %v459 = vunpack.c.l.b16 %v324
    %v460 = vunpack.c.l.b16 %v325
    %v461 = vunpack.c.l.b16 %v326
    %v462 = vunpack.c.l.b16 %v327
    %v463 = vunpack.c.l.b16 %v328
    %v464 = vunpack.c.l.b16 %v329
    %v465 = vunpack.c.l.b16 %v330
    %v466 = vunpack.c.l.b16 %v331
    %v467 = vunpack.c.l.b16 %v332
    %v468 = vunpack.c.l.b16 %v333
    %v469 = vunpack.c.l.b16 %v334
    %v470 = vunpack.c.l.b16 %v335
    %v471 = vunpack.c.l.b16 %v336
    %v472 = vunpack.c.l.b16 %v337
    %v473 = vunpack.c.l.b16 %v338
    %v474 = vunpack.c.l.b16 %v339
    %v475 = vunpack.c.l.b16 %v340
    %v476 = vunpack.c.l.b16 %v341
    %v477 = vunpack.c.l.b16 %v342
    %v478 = vunpack.c.l.b16 %v343
    %v479 = vunpack.c.l.b16 %v344
    %v480 = vunpack.c.l.b16 %v345
    %v481 = vunpack.c.l.b16 %v346
    %v482 = vunpack.c.l.b16 %v347
    %v483 = vunpack.c.l.b16 %v348
    %v484 = vunpack.c.l.b16 %v349
    %v485 = vunpack.c.l.b16 %v350
    %v486 = vunpack.c.l.b16 %v351
    %v487 = vunpack.c.l.b16 %v352
    %v488 = vunpack.c.l.b16 %v353
    %v489 = vunpack.c.l.b16 %v354
    %v490 = vunpack.c.l.b16 %v355
    %v491 = vunpack.c.l.b16 %v356
    %v492 = vunpack.c.l.b16 %v357
    %v493 = vunpack.c.l.b16 %v358
    %v494 = vunpack.c.l.b16 %v359
    %v495 = vunpack.c.l.b16 %v360
    %v496 = vunpack.c.l.b16 %v361
    %v497 = vunpack.c.l.b16 %v362
    %v498 = vunpack.c.l.b16 %v363
    %v499 = vunpack.c.l.b16 %v364
    %v500 = vunpack.c.l.b16 %v365
    %v501 = vunpack.c.l.b16 %v366
    %v502 = vunpack.c.l.b16 %v367
    %v503 = vunpack.c.l.b16 %v368
    %v504 = vunpack.c.l.b16 %v369
    %v505 = vunpack.c.l.b16 %v370
    %v506 = vunpack.c.l.b16 %v371
    %v507 = vunpack.c.l.b16 %v372
    %v508 = vunpack.c.l.b16 %v373
    %v509 = vunpack.c.l.b16 %v374
    %v510 = vpack.c.b16 %v447, %v446
    %v511 = vpack.c.b16 %v449, %v448
    %v512 = vpack.c.b16 %v451, %v450
    %v513 = vpack.c.b16 %v453, %v452
    %v514 = vpack.c.b16 %v455, %v454
    %v515 = vpack.c.b16 %v457, %v456
    %v516 = vpack.c.b16 %v459, %v458
    %v517 = vpack.c.b16 %v461, %v460
    %v518 = vpack.c.b16 %v463, %v462
    %v519 = vpack.c.b16 %v465, %v464
    %v520 = vpack.c.b16 %v467, %v466
    %v521 = vpack.c.b16 %v469, %v468
    %v522 = vpack.c.b16 %v471, %v470
    %v523 = vpack.c.b16 %v473, %v472
    %v524 = vpack.c.b16 %v475, %v474
    %v525 = vpack.c.b16 %v477, %v476
    %v526 = vpack.c.b16 %v479, %v478
    %v527 = vpack.c.b16 %v481, %v480
    %v528 = vpack.c.b16 %v483, %v482
    %v529 = vpack.c.b16 %v485, %v484
    %v530 = vpack.c.b16 %v487, %v486
    %v531 = vpack.c.b16 %v489, %v488
    %v532 = vpack.c.b16 %v491, %v490
    %v533 = vpack.c.b16 %v493, %v492
    %v534 = vpack.c.b16 %v495, %v494
    %v535 = vpack.c.b16 %v497, %v496
    %v536 = vpack.c.b16 %v499, %v498
    %v537 = vpack.c.b16 %v501, %v500
    %v538 = vpack.c.b16 %v503, %v502
    %v539 = vpack.c.b16 %v505, %v504
    %v540 = vpack.c.b16 %v507, %v506
    %v541 = vpack.c.b16 %v509, %v508
    %574 = vmatprep.subr.bf16.mxu0 0
    %575 = vmatpush1.bf16.msra.mxu0 %v517
    %576 = vmatprep.subr.bf16.mxu0 0
    %577 = vmatpush1.bf16.msra.mxu0 %v516
    %578 = vmatprep.subr.bf16.mxu0 0
    %579 = vmatpush1.bf16.msra.mxu0 %v515
    %580 = vmatprep.subr.bf16.mxu0 0
    %581 = vmatpush1.bf16.msra.mxu0 %v514
    %582 = vmatprep.subr.bf16.mxu0 0
    %583 = vmatpush1.bf16.msra.mxu0 %v513
    %584 = vmatprep.subr.bf16.mxu0 0
    %585 = vmatpush1.bf16.msra.mxu0 %v512
    %586 = vmatprep.subr.bf16.mxu0 0
    %587 = vmatpush1.bf16.msra.mxu0 %v511
    %588 = vmatprep.subr.bf16.mxu0 0
    %589 = vmatpush1.bf16.msra.mxu0 %v510
    %590 = vmatprep.subr.bf16.mxu0 0
    %591 = vmatpush2.bf16.msra.mxu0 %v525
    %592 = vmatprep.subr.bf16.mxu0 0
    %593 = vmatpush2.bf16.msra.mxu0 %v524
    %594 = vmatprep.subr.bf16.mxu0 0
    %595 = vmatpush2.bf16.msra.mxu0 %v523
    %596 = vmatprep.subr.bf16.mxu0 0
    %597 = vmatpush2.bf16.msra.mxu0 %v522
    %598 = vmatprep.subr.bf16.mxu0 0
    %599 = vmatpush2.bf16.msra.mxu0 %v521
    %600 = vmatprep.subr.bf16.mxu0 0
    %601 = vmatpush2.bf16.msra.mxu0 %v520
    %602 = vmatprep.subr.bf16.mxu0 0
    %603 = vmatpush2.bf16.msra.mxu0 %v519
    %604 = vmatprep.subr.bf16.mxu0 0
    %605 = vmatpush2.bf16.msra.mxu0 %v518
    %606 = vmatprep.mubr.bf16.mxu0 %v308
    %607 = vmatmul.mubr.bf16.gmra.mxu0 %v307
    %v608 = vpop.f32.mrf.mxu0
    %v609 = vadd.f32 %v380, %v608
    %v610 = vpop.f32.mrf.mxu0
    %v611 = vpop.f32.mrf.mxu0
    %v612 = vadd.f32 %v380, %v611
    %v613 = vpop.f32.mrf.mxu0
    %614 = vdwg.mxu0
    %615 = vmatprep.subr.bf16.mxu0 0
    %616 = vmatpush1.bf16.msra.mxu0 %v533
    %617 = vmatprep.subr.bf16.mxu0 0
    %618 = vmatpush1.bf16.msra.mxu0 %v532
    %619 = vmatprep.subr.bf16.mxu0 0
    %620 = vmatpush1.bf16.msra.mxu0 %v531
    %621 = vmatprep.subr.bf16.mxu0 0
    %622 = vmatpush1.bf16.msra.mxu0 %v530
    %623 = vmatprep.subr.bf16.mxu0 0
    %624 = vmatpush1.bf16.msra.mxu0 %v529
    %625 = vmatprep.subr.bf16.mxu0 0
    %626 = vmatpush1.bf16.msra.mxu0 %v528
    %627 = vmatprep.subr.bf16.mxu0 0
    %628 = vmatpush1.bf16.msra.mxu0 %v527
    %629 = vmatprep.subr.bf16.mxu0 0
    %630 = vmatpush1.bf16.msra.mxu0 %v526
    %631 = vmatprep.subr.bf16.mxu0 0
    %632 = vmatpush2.bf16.msra.mxu0 %v541
    %633 = vmatprep.subr.bf16.mxu0 0
    %634 = vmatpush2.bf16.msra.mxu0 %v540
    %635 = vmatprep.subr.bf16.mxu0 0
    %636 = vmatpush2.bf16.msra.mxu0 %v539
    %637 = vmatprep.subr.bf16.mxu0 0
    %638 = vmatpush2.bf16.msra.mxu0 %v538
    %639 = vmatprep.subr.bf16.mxu0 0
    %640 = vmatpush2.bf16.msra.mxu0 %v537
    %641 = vmatprep.subr.bf16.mxu0 0
    %642 = vmatpush2.bf16.msra.mxu0 %v536
    %643 = vmatprep.subr.bf16.mxu0 0
    %644 = vmatpush2.bf16.msra.mxu0 %v535
    %645 = vmatprep.subr.bf16.mxu0 0
    %646 = vmatpush2.bf16.msra.mxu0 %v534
    %647 = vmatprep.mubr.bf16.mxu0 %v310
    %648 = vmatmul.mubr.bf16.gmra.mxu0 %v309
    %v649 = vpop.f32.mrf.mxu0
    %v650 = vadd.f32 %v609, %v649
    %v651 = vpop.f32.mrf.mxu0
    %v652 = vpop.f32.mrf.mxu0
    %v653 = vadd.f32 %v612, %v652
    %v654 = vpop.f32.mrf.mxu0
    %655 = vdwg.mxu0
    %v656 = vmax.f32 %v650, 0.0
    %v657 = vmax.f32 %v653, 0.0
    %v658 = vld [vmem:[%s6] sm:$0x1]
    %v660 = vlaneseq
    %v661 = vshrl.u32 %v660, 7
    %v662 = vsub.s32 0, %v661
    %v663 = vrot.slane %v658, %v662
    %v665 = vmul.f32 %v656, %v663
    %v666 = vmul.f32 %v657, %v663
    %667 = vadd.xlane.f32.xlu0 %v665
    %v668 = vpop.xlane.xlu0 %667
    %669 = vadd.xlane.f32.xlu0 %v666
    %v670 = vpop.xlane.xlu0 %669
    %v671 = vld [vmem:[#allocation2] sm:$0x1]
    %v673 = vlaneseq
    %v674 = vshrl.u32 %v673, 7
    %v675 = vsub.s32 0, %v674
    %v676 = vrot.slane %v671, %v675
    %v678 = vadd.f32 %v668, %v676
    %v679 = vadd.f32 %v670, %v676
    %v680 = vld [vmem:[%s0] sm:$0xff]
    %v681 = vld [vmem:[%s0 + $0x8] sm:$0xff]
    %v682 = vadd.f32 %v678, %v680
    %v683 = vadd.f32 %v679, %v681
    %vm684 = vcmask 7168
    %685 = vst.msk [vmem:[%s8] sm:$0xff] %vm684, %v682
    %686 = vst.msk [vmem:[%s8 + $0x8] sm:$0xff] %vm684, %v683
    // Predicated region
    $region42: #{_forward.1} parent=1 // pred_check
      _
    $region43: #{_forward.1} parent=1 // pred_check_branch
      %688 = sbr.rel (0) target = $region45
    $region44: #{_forward.1} parent=1 // pred_region
      _
    $region45: #{_forward.1} parent=1 // pred_fallthru
      _
    // Predicated region
    $region46: #{_forward.1} parent=1 // pred_check
      _
    $region47: #{_forward.1} parent=1 // pred_check_branch
      %690 = sbr.rel (0) target = $region49
    $region48: #{_forward.1} parent=1 // pred_region
      _
    $region49: #{_forward.1} parent=1 // pred_fallthru
      _
    %691 = vsyncpa [#allocation4], 1
    %692 = vsyncpa [#allocation6], 1

</llo_original>
